<compile_context>
chip_gen: v7x
topology: tpu7x:2x2x1
jax: 0.10.0
libtpu: 0.0.40
codegen_flags: <defaults>
</compile_context>

<pallas_src>
import jax
import jax.numpy as jnp
from jax.experimental import pallas as pl
from jax.experimental.pallas import tpu as pltpu

HID_SIZE = 256


def actor_kernel(state_ref, goal_ref,
                 w1s_ref, w1g_ref, b1_ref,
                 w2_ref, b2_ref,
                 w3_ref, b3_ref,
                 w4_ref, b4_ref,
                 bounds_ref, offset_ref,
                 out_ref):
    bf16 = jnp.bfloat16
    s = state_ref[...].astype(bf16)
    g = goal_ref[...].astype(bf16)

    # Layer 1: split matmul replaces torch.cat([state, goal], dim=1) @ W1
    h = (jnp.dot(s, w1s_ref[...], preferred_element_type=jnp.float32)
         + jnp.dot(g, w1g_ref[...], preferred_element_type=jnp.float32)
         + b1_ref[...])
    h = jnp.maximum(h, 0.0)

    h = jnp.dot(h.astype(bf16), w2_ref[...],
                preferred_element_type=jnp.float32) + b2_ref[...]
    h = jnp.maximum(h, 0.0)

    h = jnp.dot(h.astype(bf16), w3_ref[...],
                preferred_element_type=jnp.float32) + b3_ref[...]
    h = jnp.maximum(h, 0.0)

    a = jnp.dot(h.astype(bf16), w4_ref[...],
                preferred_element_type=jnp.float32) + b4_ref[...]
    a = jnp.tanh(a)

    # * action_bounds + offset  (broadcast (1, act_pad) over the batch tile)
    out_ref[...] = a * bounds_ref[...] + offset_ref[...]


def actor_forward(state, goal, params):
    """params: w1..w4 in (in,out) layout, b1..b4 (1,out), bounds/offset (1,act)."""
    batch, obs_size = state.shape
    goal_size = goal.shape[1]
    act_size = params["w4"].shape[1]

    # ---- Batch tiling: 512 rows per grid step (multiple of the 8-sublane
    # quantum); small batches get a single padded tile.
    TB = 512
    if batch < TB:
        TB = ((batch + 7) // 8) * 8
    n_tiles = pl.cdiv(batch, TB)
    b_pad = n_tiles * TB
    if b_pad != batch:
        pad = b_pad - batch
        state = jnp.pad(state, ((0, pad), (0, 0)))
        goal = jnp.pad(goal, ((0, pad), (0, 0)))

    # ---- Lane-dense action dimension: pad to a multiple of 128 so the output
    # store is an unmasked vst and the last matmul tile fills full vregs.
    act_pad = max(128, ((act_size + 127) // 128) * 128)

    # bf16 weights (halves weight HBM->VMEM bytes); split w1 by input source.
    bf16 = jnp.bfloat16
    w1s = params["w1"][:obs_size].astype(bf16)
    w1g = params["w1"][obs_size:].astype(bf16)
    w2 = params["w2"].astype(bf16)
    w3 = params["w3"].astype(bf16)
    b1, b2, b3 = params["b1"], params["b2"], params["b3"]

    pad_a = act_pad - act_size
    w4 = jnp.pad(params["w4"], ((0, 0), (0, pad_a))).astype(bf16)
    b4 = jnp.pad(params["b4"], ((0, 0), (0, pad_a)))
    bounds = jnp.pad(params["bounds"], ((0, 0), (0, pad_a)))
    offset = jnp.pad(params["offset"], ((0, 0), (0, pad_a)))

    def tile_spec(feat):
        # batch-tiled operand: block (TB, feat), advancing with the grid index
        return pl.BlockSpec((TB, feat), lambda i: (i, 0))

    def resident_spec(arr):
        # whole-array operand, same block every grid step (stays in VMEM)
        return pl.BlockSpec(arr.shape, lambda i: (0, 0))

    in_specs = [
        tile_spec(obs_size),          # state
        tile_spec(goal_size),         # goal
        resident_spec(w1s), resident_spec(w1g), resident_spec(b1),
        resident_spec(w2), resident_spec(b2),
        resident_spec(w3), resident_spec(b3),
        resident_spec(w4), resident_spec(b4),
        resident_spec(bounds), resident_spec(offset),
    ]
    out_specs = pl.BlockSpec((TB, act_pad), lambda i: (i, 0))

    out = pl.pallas_call(
        actor_kernel,
        out_shape=jax.ShapeDtypeStruct((b_pad, act_pad), jnp.float32),
        grid=(n_tiles,),
        in_specs=in_specs,
        out_specs=out_specs,
        compiler_params=pltpu.CompilerParams(
            dimension_semantics=("parallel",)),
    )(state, goal,
      w1s, w1g, b1, w2, b2, w3, b3, w4, b4, bounds, offset)

    return out[:batch, :act_size]


def init_params(key, obs_size, goal_size, act_size):
    """Deterministic synthetic init (PyTorch Linear shapes, pre-transposed)."""
    in_size = obs_size + goal_size
    dims = [(in_size, HID_SIZE), (HID_SIZE, HID_SIZE),
            (HID_SIZE, HID_SIZE), (HID_SIZE, act_size)]
    params = {}
    keys = jax.random.split(key, 2 * len(dims) + 2)
    for i, (fan_in, fan_out) in enumerate(dims):
        bound = 1.0 / jnp.sqrt(fan_in)
        params[f"w{i+1}"] = jax.random.uniform(
            keys[2 * i], (fan_in, fan_out), jnp.float32, -bound, bound)
        params[f"b{i+1}"] = jax.random.uniform(
            keys[2 * i + 1], (1, fan_out), jnp.float32, -bound, bound)
    params["bounds"] = jax.random.uniform(
        keys[-2], (1, act_size), jnp.float32, 0.5, 2.0)
    params["offset"] = jax.random.uniform(
        keys[-1], (1, act_size), jnp.float32, -0.5, 0.5)
    return params


def reference_forward(state, goal, p):
    """Numerics-matched reference: same bf16 matmul inputs, f32 accumulation."""
    bf = lambda x: x.astype(jnp.bfloat16)
    x = jnp.concatenate([state, goal], axis=1)
    h = jnp.maximum(jnp.dot(bf(x), bf(p["w1"]),
                            preferred_element_type=jnp.float32) + p["b1"], 0.0)
    h = jnp.maximum(jnp.dot(bf(h), bf(p["w2"]),
                            preferred_element_type=jnp.float32) + p["b2"], 0.0)
    h = jnp.maximum(jnp.dot(bf(h), bf(p["w3"]),
                            preferred_element_type=jnp.float32) + p["b3"], 0.0)
    a = jnp.tanh(jnp.dot(bf(h), bf(p["w4"]),
                         preferred_element_type=jnp.float32) + p["b4"])
    return a * p["bounds"] + p["offset"]


if __name__ == "__main__":
    key = jax.random.PRNGKey(0)
    batch, obs_size, goal_size, act_size = 8, 16, 16, 8

    k_s, k_g, k_p, k_s2, k_g2 = jax.random.split(key, 5)
    state = jax.random.normal(k_s, (batch, obs_size), jnp.float32)
    goal = jax.random.normal(k_g, (batch, goal_size), jnp.float32)
    params = init_params(k_p, obs_size, goal_size, act_size)

    out = actor_forward(state, goal, params)
    jax.block_until_ready(out)
    ref = reference_forward(state, goal, params)
    assert out.shape == (batch, act_size)
    assert jnp.allclose(out, ref, atol=1e-4, rtol=1e-4), "mismatch vs reference"

    # Exercise the multi-tile grid + batch/action padding paths.
    big_batch = 1100
    state2 = jax.random.normal(k_s2, (big_batch, obs_size), jnp.float32)
    goal2 = jax.random.normal(k_g2, (big_batch, goal_size), jnp.float32)
    out2 = actor_forward(state2, goal2, params)
    jax.block_until_ready(out2)
    ref2 = reference_forward(state2, goal2, params)
    assert out2.shape == (big_batch, act_size)
    assert jnp.allclose(out2, ref2, atol=1e-4, rtol=1e-4), "mismatch (big batch)"

    print("KERNEL_OK")
</pallas_src>

<mosaic_0001>
module attributes {stable_mosaic.version = 11 : i64} {
  func.func @actor_kernel(%arg0: i32, %arg1: memref<8x16xf32, #tpu.memory_space<vmem>>, %arg2: memref<8x16xf32, #tpu.memory_space<vmem>>, %arg3: memref<16x256xbf16, #tpu.memory_space<vmem>>, %arg4: memref<16x256xbf16, #tpu.memory_space<vmem>>, %arg5: memref<1x256xf32, #tpu.memory_space<vmem>>, %arg6: memref<256x256xbf16, #tpu.memory_space<vmem>>, %arg7: memref<1x256xf32, #tpu.memory_space<vmem>>, %arg8: memref<256x256xbf16, #tpu.memory_space<vmem>>, %arg9: memref<1x256xf32, #tpu.memory_space<vmem>>, %arg10: memref<256x128xbf16, #tpu.memory_space<vmem>>, %arg11: memref<1x128xf32, #tpu.memory_space<vmem>>, %arg12: memref<1x128xf32, #tpu.memory_space<vmem>>, %arg13: memref<1x128xf32, #tpu.memory_space<vmem>>, %arg14: memref<8x128xf32, #tpu.memory_space<vmem>>) attributes {dimension_semantics = [#tpu.dimension_semantics<parallel>], iteration_bounds = array<i64: 1>, scalar_prefetch = 0 : i64, scratch_operands = 0 : i64, tpu.core_type = #tpu.core_type<tc>, window_params = [{transform_indices = @transform_0, window_bounds = array<i64: 8, 16>}, {transform_indices = @transform_1, window_bounds = array<i64: 8, 16>}, {pipeline_mode = #tpu.pipeline_mode<synchronous>, transform_indices = @transform_2, window_bounds = array<i64: 16, 256>}, {pipeline_mode = #tpu.pipeline_mode<synchronous>, transform_indices = @transform_3, window_bounds = array<i64: 16, 256>}, {pipeline_mode = #tpu.pipeline_mode<synchronous>, transform_indices = @transform_4, window_bounds = array<i64: 1, 256>}, {pipeline_mode = #tpu.pipeline_mode<synchronous>, transform_indices = @transform_5, window_bounds = array<i64: 256, 256>}, {pipeline_mode = #tpu.pipeline_mode<synchronous>, transform_indices = @transform_6, window_bounds = array<i64: 1, 256>}, {pipeline_mode = #tpu.pipeline_mode<synchronous>, transform_indices = @transform_7, window_bounds = array<i64: 256, 256>}, {pipeline_mode = #tpu.pipeline_mode<synchronous>, transform_indices = @transform_8, window_bounds = array<i64: 1, 256>}, {pipeline_mode = #tpu.pipeline_mode<synchronous>, transform_indices = @transform_9, window_bounds = array<i64: 256, 128>}, {pipeline_mode = #tpu.pipeline_mode<synchronous>, transform_indices = @transform_10, window_bounds = array<i64: 1, 128>}, {pipeline_mode = #tpu.pipeline_mode<synchronous>, transform_indices = @transform_11, window_bounds = array<i64: 1, 128>}, {pipeline_mode = #tpu.pipeline_mode<synchronous>, transform_indices = @transform_12, window_bounds = array<i64: 1, 128>}, {transform_indices = @transform_13, window_bounds = array<i64: 8, 128>}]} {
    %c0 = arith.constant 0 : index
    %c0_0 = arith.constant 0 : index
    %0 = vector.load %arg1[%c0, %c0_0] : memref<8x16xf32, #tpu.memory_space<vmem>>, vector<8x16xf32>
    %1 = arith.truncf %0 : vector<8x16xf32> to vector<8x16xbf16>
    %c0_1 = arith.constant 0 : index
    %c0_2 = arith.constant 0 : index
    %2 = vector.load %arg2[%c0_1, %c0_2] : memref<8x16xf32, #tpu.memory_space<vmem>>, vector<8x16xf32>
    %3 = arith.truncf %2 : vector<8x16xf32> to vector<8x16xbf16>
    %c0_3 = arith.constant 0 : index
    %c0_4 = arith.constant 0 : index
    %4 = vector.load %arg3[%c0_3, %c0_4] : memref<16x256xbf16, #tpu.memory_space<vmem>>, vector<16x256xbf16>
    %cst = arith.constant dense<0.000000e+00> : vector<8x256xf32>
    %5 = tpu.matmul %1, %4, %cst {dimension_numbers = #tpu.dot_dimension_numbers<[1], [0], [0], [1], [0, 0, 1, 1], [], []>} : vector<8x16xbf16>, vector<16x256xbf16>, vector<8x256xf32> -> vector<8x256xf32>
    %c0_5 = arith.constant 0 : index
    %c0_6 = arith.constant 0 : index
    %6 = vector.load %arg4[%c0_5, %c0_6] : memref<16x256xbf16, #tpu.memory_space<vmem>>, vector<16x256xbf16>
    %cst_7 = arith.constant dense<0.000000e+00> : vector<8x256xf32>
    %7 = tpu.matmul %3, %6, %cst_7 {dimension_numbers = #tpu.dot_dimension_numbers<[1], [0], [0], [1], [0, 0, 1, 1], [], []>} : vector<8x16xbf16>, vector<16x256xbf16>, vector<8x256xf32> -> vector<8x256xf32>
    %8 = arith.addf %5, %7 : vector<8x256xf32>
    %c0_8 = arith.constant 0 : index
    %c0_9 = arith.constant 0 : index
    %9 = vector.load %arg5[%c0_8, %c0_9] : memref<1x256xf32, #tpu.memory_space<vmem>>, vector<1x256xf32>
    %10 = vector.broadcast %9 : vector<1x256xf32> to vector<8x256xf32>
    %11 = arith.addf %8, %10 : vector<8x256xf32>
    %cst_10 = arith.constant 0.000000e+00 : f32
    %12 = vector.broadcast %cst_10 : f32 to vector<8x256xf32>
    %13 = arith.maximumf %11, %12 : vector<8x256xf32>
    %14 = arith.truncf %13 : vector<8x256xf32> to vector<8x256xbf16>
    %c0_11 = arith.constant 0 : index
    %c0_12 = arith.constant 0 : index
    %15 = vector.load %arg6[%c0_11, %c0_12] : memref<256x256xbf16, #tpu.memory_space<vmem>>, vector<256x256xbf16>
    %cst_13 = arith.constant dense<0.000000e+00> : vector<8x256xf32>
    %16 = tpu.matmul %14, %15, %cst_13 {dimension_numbers = #tpu.dot_dimension_numbers<[1], [0], [0], [1], [0, 0, 1, 1], [], []>} : vector<8x256xbf16>, vector<256x256xbf16>, vector<8x256xf32> -> vector<8x256xf32>
    %c0_14 = arith.constant 0 : index
    %c0_15 = arith.constant 0 : index
    %17 = vector.load %arg7[%c0_14, %c0_15] : memref<1x256xf32, #tpu.memory_space<vmem>>, vector<1x256xf32>
    %18 = vector.broadcast %17 : vector<1x256xf32> to vector<8x256xf32>
    %19 = arith.addf %16, %18 : vector<8x256xf32>
    %cst_16 = arith.constant 0.000000e+00 : f32
    %20 = vector.broadcast %cst_16 : f32 to vector<8x256xf32>
    %21 = arith.maximumf %19, %20 : vector<8x256xf32>
    %22 = arith.truncf %21 : vector<8x256xf32> to vector<8x256xbf16>
    %c0_17 = arith.constant 0 : index
    %c0_18 = arith.constant 0 : index
    %23 = vector.load %arg8[%c0_17, %c0_18] : memref<256x256xbf16, #tpu.memory_space<vmem>>, vector<256x256xbf16>
    %cst_19 = arith.constant dense<0.000000e+00> : vector<8x256xf32>
    %24 = tpu.matmul %22, %23, %cst_19 {dimension_numbers = #tpu.dot_dimension_numbers<[1], [0], [0], [1], [0, 0, 1, 1], [], []>} : vector<8x256xbf16>, vector<256x256xbf16>, vector<8x256xf32> -> vector<8x256xf32>
    %c0_20 = arith.constant 0 : index
    %c0_21 = arith.constant 0 : index
    %25 = vector.load %arg9[%c0_20, %c0_21] : memref<1x256xf32, #tpu.memory_space<vmem>>, vector<1x256xf32>
    %26 = vector.broadcast %25 : vector<1x256xf32> to vector<8x256xf32>
    %27 = arith.addf %24, %26 : vector<8x256xf32>
    %cst_22 = arith.constant 0.000000e+00 : f32
    %28 = vector.broadcast %cst_22 : f32 to vector<8x256xf32>
    %29 = arith.maximumf %27, %28 : vector<8x256xf32>
    %30 = arith.truncf %29 : vector<8x256xf32> to vector<8x256xbf16>
    %c0_23 = arith.constant 0 : index
    %c0_24 = arith.constant 0 : index
    %31 = vector.load %arg10[%c0_23, %c0_24] : memref<256x128xbf16, #tpu.memory_space<vmem>>, vector<256x128xbf16>
    %cst_25 = arith.constant dense<0.000000e+00> : vector<8x128xf32>
    %32 = tpu.matmul %30, %31, %cst_25 {dimension_numbers = #tpu.dot_dimension_numbers<[1], [0], [0], [1], [0, 0, 1, 1], [], []>} : vector<8x256xbf16>, vector<256x128xbf16>, vector<8x128xf32> -> vector<8x128xf32>
    %c0_26 = arith.constant 0 : index
    %c0_27 = arith.constant 0 : index
    %33 = vector.load %arg11[%c0_26, %c0_27] : memref<1x128xf32, #tpu.memory_space<vmem>>, vector<1x128xf32>
    %34 = vector.broadcast %33 : vector<1x128xf32> to vector<8x128xf32>
    %35 = arith.addf %32, %34 : vector<8x128xf32>
    %36 = math.tanh %35 : vector<8x128xf32>
    %c0_28 = arith.constant 0 : index
    %c0_29 = arith.constant 0 : index
    %37 = vector.load %arg12[%c0_28, %c0_29] : memref<1x128xf32, #tpu.memory_space<vmem>>, vector<1x128xf32>
    %38 = vector.broadcast %37 : vector<1x128xf32> to vector<8x128xf32>
    %39 = arith.mulf %36, %38 : vector<8x128xf32>
    %c0_30 = arith.constant 0 : index
    %c0_31 = arith.constant 0 : index
    %40 = vector.load %arg13[%c0_30, %c0_31] : memref<1x128xf32, #tpu.memory_space<vmem>>, vector<1x128xf32>
    %41 = vector.broadcast %40 : vector<1x128xf32> to vector<8x128xf32>
    %42 = arith.addf %39, %41 : vector<8x128xf32>
    %c0_32 = arith.constant 0 : index
    %c0_33 = arith.constant 0 : index
    %43 = vector.load %arg14[%c0_32, %c0_33] : memref<8x128xf32, #tpu.memory_space<vmem>>, vector<8x128xf32>
    tpu.vector_store %arg14[%c0_32, %c0_33], %42 {strides = array<i32>} : memref<8x128xf32, #tpu.memory_space<vmem>>, vector<8x128xf32>,
    return
  }
  func.func @transform_0(%arg0: i32) -> (i32, i32) {
    %c0_i32 = arith.constant 0 : i32
    %c0_i32_0 = arith.constant 0 : i32
    return %arg0, %c0_i32 : i32, i32
  }
  func.func @transform_1(%arg0: i32) -> (i32, i32) {
    %c0_i32 = arith.constant 0 : i32
    %c0_i32_0 = arith.constant 0 : i32
    return %arg0, %c0_i32 : i32, i32
  }
  func.func @transform_2(%arg0: i32) -> (i32, i32) {
    %c0_i32 = arith.constant 0 : i32
    %c0_i32_0 = arith.constant 0 : i32
    %c0_i32_1 = arith.constant 0 : i32
    return %c0_i32, %c0_i32_0 : i32, i32
  }
  func.func @transform_3(%arg0: i32) -> (i32, i32) {
    %c0_i32 = arith.constant 0 : i32
    %c0_i32_0 = arith.constant 0 : i32
    %c0_i32_1 = arith.constant 0 : i32
    return %c0_i32, %c0_i32_0 : i32, i32
  }
  func.func @transform_4(%arg0: i32) -> (i32, i32) {
    %c0_i32 = arith.constant 0 : i32
    %c0_i32_0 = arith.constant 0 : i32
    %c0_i32_1 = arith.constant 0 : i32
    return %c0_i32, %c0_i32_0 : i32, i32
  }
  func.func @transform_5(%arg0: i32) -> (i32, i32) {
    %c0_i32 = arith.constant 0 : i32
    %c0_i32_0 = arith.constant 0 : i32
    %c0_i32_1 = arith.constant 0 : i32
    return %c0_i32, %c0_i32_0 : i32, i32
  }
  func.func @transform_6(%arg0: i32) -> (i32, i32) {
    %c0_i32 = arith.constant 0 : i32
    %c0_i32_0 = arith.constant 0 : i32
    %c0_i32_1 = arith.constant 0 : i32
    return %c0_i32, %c0_i32_0 : i32, i32
  }
  func.func @transform_7(%arg0: i32) -> (i32, i32) {
    %c0_i32 = arith.constant 0 : i32
    %c0_i32_0 = arith.constant 0 : i32
    %c0_i32_1 = arith.constant 0 : i32
    return %c0_i32, %c0_i32_0 : i32, i32
  }
  func.func @transform_8(%arg0: i32) -> (i32, i32) {
    %c0_i32 = arith.constant 0 : i32
    %c0_i32_0 = arith.constant 0 : i32
    %c0_i32_1 = arith.constant 0 : i32
    return %c0_i32, %c0_i32_0 : i32, i32
  }
  func.func @transform_9(%arg0: i32) -> (i32, i32) {
    %c0_i32 = arith.constant 0 : i32
    %c0_i32_0 = arith.constant 0 : i32
    %c0_i32_1 = arith.constant 0 : i32
    return %c0_i32, %c0_i32_0 : i32, i32
  }
  func.func @transform_10(%arg0: i32) -> (i32, i32) {
    %c0_i32 = arith.constant 0 : i32
    %c0_i32_0 = arith.constant 0 : i32
    %c0_i32_1 = arith.constant 0 : i32
    return %c0_i32, %c0_i32_0 : i32, i32
  }
  func.func @transform_11(%arg0: i32) -> (i32, i32) {
    %c0_i32 = arith.constant 0 : i32
    %c0_i32_0 = arith.constant 0 : i32
    %c0_i32_1 = arith.constant 0 : i32
    return %c0_i32, %c0_i32_0 : i32, i32
  }
  func.func @transform_12(%arg0: i32) -> (i32, i32) {
    %c0_i32 = arith.constant 0 : i32
    %c0_i32_0 = arith.constant 0 : i32
    %c0_i32_1 = arith.constant 0 : i32
    return %c0_i32, %c0_i32_0 : i32, i32
  }
  func.func @transform_13(%arg0: i32) -> (i32, i32) {
    %c0_i32 = arith.constant 0 : i32
    %c0_i32_0 = arith.constant 0 : i32
    return %arg0, %c0_i32 : i32, i32
  }
}

</mosaic_0001>

<llo_original>
// kernel: tpu_custom_call.1
$region0: #{tpu_custom_call.1}
  #allocation0 [shape = 'u32[]', space=smem, size = 0x4, offset = 0x4, fixed_abs, tag = 'smem constant byte address 0x4 - core index']
  #allocation1 [shape = 'u32[144,128]{1,0:T(1,128)}', space=vmem, size = 0x12000, scoped, tag = 'internal scratch']
  %s0 = inlined_call_operand.hbm [shape: f32[8,16], index: 0, kind: input, shape index: {}]
  %s1 = inlined_call_operand.hbm [shape: f32[8,16], index: 1, kind: input, shape index: {}]
  %s2 = inlined_call_operand.hbm [shape: bf16[16,256], index: 2, kind: input, shape index: {}]
  %s3 = inlined_call_operand.hbm [shape: bf16[16,256], index: 3, kind: input, shape index: {}]
  %s4 = inlined_call_operand.vmem [shape: f32[1,256], index: 4, kind: input, shape index: {}]
  %s5 = inlined_call_operand.hbm [shape: bf16[256,256], index: 5, kind: input, shape index: {}]
  %s6 = inlined_call_operand.vmem [shape: f32[1,256], index: 6, kind: input, shape index: {}]
  %s7 = inlined_call_operand.hbm [shape: bf16[256,256], index: 7, kind: input, shape index: {}]
  %s8 = inlined_call_operand.vmem [shape: f32[1,256], index: 8, kind: input, shape index: {}]
  %s9 = inlined_call_operand.hbm [shape: bf16[256,128], index: 9, kind: input, shape index: {}]
  %s10 = inlined_call_operand.vmem [shape: f32[1,128], index: 10, kind: input, shape index: {}]
  %s11 = inlined_call_operand.vmem [shape: f32[1,128], index: 11, kind: input, shape index: {}]
  %s12 = inlined_call_operand.vmem [shape: f32[1,128], index: 12, kind: input, shape index: {}]
  %s13 = inlined_call_operand.hbm [shape: f32[8,128], index: 13, kind: output, shape index: {}]
  %s14 = sld [smem:[#allocation0]]
  $region90: #{tpu_custom_call.1} parent=0
    _
  %s16 = ssub.s32 1, %s14
  %s17 = scalar_select 0, %s16, %s14
  $region1: #{tpu_custom_call.1} parent=0
    #allocation2 [shape = 'u8[4096]{0}', space=vmem, size = 0x1000, scoped, tag = 'input window, operand 0, single buffered']
    #allocation3 [shape = 's32[1]{0}', space=sflag, size = 0x4, scoped, tag = 'scoped memory for tpu_custom_call.1']
    #allocation4 [shape = 's32[1]{0}', space=sflag, size = 0x4, scoped, tag = 'scoped memory for tpu_custom_call.1']
    #allocation5 [shape = 'u8[4096]{0}', space=vmem, size = 0x1000, scoped, tag = 'input window, operand 1, single buffered']
    #allocation6 [shape = 's32[1]{0}', space=sflag, size = 0x4, scoped, tag = 'scoped memory for tpu_custom_call.1']
    #allocation7 [shape = 'u8[8192]{0}', space=vmem, size = 0x2000, scoped, tag = 'input window, operand 2, single buffered']
    #allocation8 [shape = 'u8[8192]{0}', space=vmem, size = 0x2000, scoped, tag = 'input window, operand 3, single buffered']
    #allocation9 [shape = 's32[1]{0}', space=sflag, size = 0x4, scoped, tag = 'scoped memory for tpu_custom_call.1']
    #allocation10 [shape = 'u8[131072]{0}', space=vmem, size = 0x20000, scoped, tag = 'input window, operand 5, single buffered']
    #allocation11 [shape = 'u8[131072]{0}', space=vmem, size = 0x20000, scoped, tag = 'input window, operand 7, single buffered']
    #allocation12 [shape = 's32[1]{0}', space=sflag, size = 0x4, scoped, tag = 'scoped memory for tpu_custom_call.1']
    #allocation13 [shape = 'u8[65536]{0}', space=vmem, size = 0x10000, scoped, tag = 'input window, operand 9, single buffered']
    #allocation14 [shape = 'u8[4096]{0}', space=vmem, size = 0x1000, scoped, tag = 'output window, operand 0, single buffered']
    %18 = vsyncpa [#allocation3], 0
    %19 = vsyncpa [#allocation6], 0
    %20 = vsyncpa [#allocation9], 0
    %21 = vsyncpa [#allocation12], 0
    %22 = vsyncpa [#allocation4], 0
    // Predicated region
    $region2: #{tpu_custom_call.1} parent=1 // pred_check
      _
    $region3: #{tpu_custom_call.1} parent=1 // pred_check_branch
      %24 = sbr.rel (0) target = $region5
    $region4: #{tpu_custom_call.1} parent=1 // pred_region
      %s26 = ssub.s32 128, 128
      %27 = vsyncadd [#allocation3], %s26
      %s29 = sshll.u32 [#allocation2], 4
      %s30 = int_to_ptr.vmem [resolvable:$true] %s29
      %32 = dma.hbm_to_vmem [thread:$0]  %s0, 128, %s30, [#allocation3]
    $region5: #{tpu_custom_call.1} parent=1 // pred_fallthru
      _
    // Predicated region
    $region6: #{tpu_custom_call.1} parent=1 // pred_check
      _
    $region7: #{tpu_custom_call.1} parent=1 // pred_check_branch
      %34 = sbr.rel (0) target = $region9
    $region8: #{tpu_custom_call.1} parent=1 // pred_region
      %s36 = ssub.s32 128, 128
      %37 = vsyncadd [#allocation6], %s36
      %s39 = sshll.u32 [#allocation5], 4
      %s40 = int_to_ptr.vmem [resolvable:$true] %s39
      %42 = dma.hbm_to_vmem [thread:$0]  %s1, 128, %s40, [#allocation6]
    $region9: #{tpu_custom_call.1} parent=1 // pred_fallthru
      _
    // Predicated region
    $region10: #{tpu_custom_call.1} parent=1 // pred_check
      _
    $region11: #{tpu_custom_call.1} parent=1 // pred_check_branch
      %44 = sbr.rel (0) target = $region13
    $region12: #{tpu_custom_call.1} parent=1 // pred_region
      %s46 = ssub.s32 256, 256
      %47 = vsyncadd [#allocation6], %s46
      %s48 = sshll.u32 [#allocation7], 4
      %s49 = int_to_ptr.vmem [resolvable:$true] %s48
      %54 = dma.hbm_to_vmem [thread:$0]  %s2, 256, %s49, [#allocation6], 128, 128, 8
    $region13: #{tpu_custom_call.1} parent=1 // pred_fallthru
      _
    // Predicated region
    $region14: #{tpu_custom_call.1} parent=1 // pred_check
      _
    $region15: #{tpu_custom_call.1} parent=1 // pred_check_branch
      %56 = sbr.rel (0) target = $region17
    $region16: #{tpu_custom_call.1} parent=1 // pred_region
      %s58 = ssub.s32 256, 256
      %59 = vsyncadd [#allocation9], %s58
      %s60 = sshll.u32 [#allocation8], 4
      %s61 = int_to_ptr.vmem [resolvable:$true] %s60
      %66 = dma.hbm_to_vmem [thread:$0]  %s3, 256, %s61, [#allocation9], 128, 128, 8
    $region17: #{tpu_custom_call.1} parent=1 // pred_fallthru
      _
    // Predicated region
    $region18: #{tpu_custom_call.1} parent=1 // pred_check
      _
    $region19: #{tpu_custom_call.1} parent=1 // pred_check_branch
      %68 = sbr.rel (0) target = $region21
    $region20: #{tpu_custom_call.1} parent=1 // pred_region
      _
    $region21: #{tpu_custom_call.1} parent=1 // pred_fallthru
      _
    // Predicated region
    $region22: #{tpu_custom_call.1} parent=1 // pred_check
      _
    $region23: #{tpu_custom_call.1} parent=1 // pred_check_branch
      %70 = sbr.rel (0) target = $region25
    $region24: #{tpu_custom_call.1} parent=1 // pred_region
      %s72 = ssub.s32 4096, 4096
      %73 = vsyncadd [#allocation9], %s72
      %s74 = sshll.u32 [#allocation10], 4
      %s75 = int_to_ptr.vmem [resolvable:$true] %s74
      %80 = dma.hbm_to_vmem [thread:$0]  %s5, 4096, %s75, [#allocation9], 128, 128, 8
    $region25: #{tpu_custom_call.1} parent=1 // pred_fallthru
      _
    // Predicated region
    $region26: #{tpu_custom_call.1} parent=1 // pred_check
      _
    $region27: #{tpu_custom_call.1} parent=1 // pred_check_branch
      %82 = sbr.rel (0) target = $region29
    $region28: #{tpu_custom_call.1} parent=1 // pred_region
      _
    $region29: #{tpu_custom_call.1} parent=1 // pred_fallthru
      _
    // Predicated region
    $region30: #{tpu_custom_call.1} parent=1 // pred_check
      _
    $region31: #{tpu_custom_call.1} parent=1 // pred_check_branch
      %84 = sbr.rel (0) target = $region33
    $region32: #{tpu_custom_call.1} parent=1 // pred_region
      %s86 = ssub.s32 4096, 4096
      %87 = vsyncadd [#allocation12], %s86
      %s88 = sshll.u32 [#allocation11], 4
      %s89 = int_to_ptr.vmem [resolvable:$true] %s88
      %94 = dma.hbm_to_vmem [thread:$0]  %s7, 4096, %s89, [#allocation12], 128, 128, 8
    $region33: #{tpu_custom_call.1} parent=1 // pred_fallthru
      _
    // Predicated region
    $region34: #{tpu_custom_call.1} parent=1 // pred_check
      _
    $region35: #{tpu_custom_call.1} parent=1 // pred_check_branch
      %96 = sbr.rel (0) target = $region37
    $region36: #{tpu_custom_call.1} parent=1 // pred_region
      _
    $region37: #{tpu_custom_call.1} parent=1 // pred_fallthru
      _
    // Predicated region
    $region38: #{tpu_custom_call.1} parent=1 // pred_check
      _
    $region39: #{tpu_custom_call.1} parent=1 // pred_check_branch
      %98 = sbr.rel (0) target = $region41
    $region40: #{tpu_custom_call.1} parent=1 // pred_region
      %s100 = ssub.s32 2048, 2048
      %101 = vsyncadd [#allocation12], %s100
      %s102 = sshll.u32 [#allocation13], 4
      %s103 = int_to_ptr.vmem [resolvable:$true] %s102
      %108 = dma.hbm_to_vmem [thread:$0]  %s9, 2048, %s103, [#allocation12], 64, 64, 4
    $region41: #{tpu_custom_call.1} parent=1 // pred_fallthru
      _
    // Predicated region
    $region42: #{tpu_custom_call.1} parent=1 // pred_check
      _
    $region43: #{tpu_custom_call.1} parent=1 // pred_check_branch
      %110 = sbr.rel (0) target = $region45
    $region44: #{tpu_custom_call.1} parent=1 // pred_region
      _
    $region45: #{tpu_custom_call.1} parent=1 // pred_fallthru
      _
    // Predicated region
    $region46: #{tpu_custom_call.1} parent=1 // pred_check
      _
    $region47: #{tpu_custom_call.1} parent=1 // pred_check_branch
      %112 = sbr.rel (0) target = $region49
    $region48: #{tpu_custom_call.1} parent=1 // pred_region
      _
    $region49: #{tpu_custom_call.1} parent=1 // pred_fallthru
      _
    // Predicated region
    $region50: #{tpu_custom_call.1} parent=1 // pred_check
      _
    $region51: #{tpu_custom_call.1} parent=1 // pred_check_branch
      %114 = sbr.rel (0) target = $region53
    $region52: #{tpu_custom_call.1} parent=1 // pred_region
      _
    $region53: #{tpu_custom_call.1} parent=1 // pred_fallthru
      _
    // Predicated region
    $region54: #{tpu_custom_call.1} parent=1 // pred_check
      _
    $region55: #{tpu_custom_call.1} parent=1 // pred_check_branch
      %116 = sbr.rel (0) target = $region57
    $region56: #{tpu_custom_call.1} parent=1 // pred_region
      %117 = dma.done [#allocation3], 128
    $region57: #{tpu_custom_call.1} parent=1 // pred_fallthru
      _
    // Predicated region
    $region58: #{tpu_custom_call.1} parent=1 // pred_check
      _
    $region59: #{tpu_custom_call.1} parent=1 // pred_check_branch
      %119 = sbr.rel (0) target = $region61
    $region60: #{tpu_custom_call.1} parent=1 // pred_region
      %120 = dma.done [#allocation6], 128
    $region61: #{tpu_custom_call.1} parent=1 // pred_fallthru
      _
    // Predicated region
    $region62: #{tpu_custom_call.1} parent=1 // pred_check
      _
    $region63: #{tpu_custom_call.1} parent=1 // pred_check_branch
      %122 = sbr.rel (0) target = $region65
    $region64: #{tpu_custom_call.1} parent=1 // pred_region
      %123 = dma.done [#allocation6], 256
    $region65: #{tpu_custom_call.1} parent=1 // pred_fallthru
      _
    // Predicated region
    $region66: #{tpu_custom_call.1} parent=1 // pred_check
      _
    $region67: #{tpu_custom_call.1} parent=1 // pred_check_branch
      %125 = sbr.rel (0) target = $region69
    $region68: #{tpu_custom_call.1} parent=1 // pred_region
      %126 = dma.done [#allocation9], 256
    $region69: #{tpu_custom_call.1} parent=1 // pred_fallthru
      _
    // Predicated region
    $region70: #{tpu_custom_call.1} parent=1 // pred_check
      _
    $region71: #{tpu_custom_call.1} parent=1 // pred_check_branch
      %128 = sbr.rel (0) target = $region73
    $region72: #{tpu_custom_call.1} parent=1 // pred_region
      %129 = dma.done [#allocation9], 4096
    $region73: #{tpu_custom_call.1} parent=1 // pred_fallthru
      _
    // Predicated region
    $region74: #{tpu_custom_call.1} parent=1 // pred_check
      _
    $region75: #{tpu_custom_call.1} parent=1 // pred_check_branch
      %131 = sbr.rel (0) target = $region77
    $region76: #{tpu_custom_call.1} parent=1 // pred_region
      %132 = dma.done [#allocation12], 4096
    $region77: #{tpu_custom_call.1} parent=1 // pred_fallthru
      _
    // Predicated region
    $region78: #{tpu_custom_call.1} parent=1 // pred_check
      _
    $region79: #{tpu_custom_call.1} parent=1 // pred_check_branch
      %134 = sbr.rel (0) target = $region81
    $region80: #{tpu_custom_call.1} parent=1 // pred_region
      %135 = dma.done [#allocation12], 2048
    $region81: #{tpu_custom_call.1} parent=1 // pred_fallthru
      _
    %v137 = vld [vmem:[#allocation2] sm:$0xff]
    %v138 = vpack.c.bf16 %v137, %v137
    %v139 = vld [vmem:[#allocation5] sm:$0xff]
    %v140 = vpack.c.bf16 %v139, %v139
    %v141 = vld [vmem:[#allocation7] sm:$0xff]
    %v142 = vld [vmem:[#allocation7 + $0x8] sm:$0xff]
    %v143 = vld [vmem:[#allocation8] sm:$0xff]
    %v144 = vld [vmem:[#allocation8 + $0x8] sm:$0xff]
    %v147 = vunpack.c.l.b16 %v143
    %v148 = vunpack.c.h.b16 %v143
    %v149 = vunpack.c.l.b16 %v144
    %v150 = vunpack.c.h.b16 %v144
    %v151 = vpack.c.b16 %v149, %v147
    %v152 = vpack.c.b16 %v150, %v148
    %vm155 = vcmask 130048
    %v157 = vsel %vm155, %v140, 0
    %159 = vmatprep.subr.bf16.mxu0 %v152
    %160 = vmatpush1.bf16.msra.mxu0 %v151
    %161 = vmatprep.subr.bf16.mxu0 0
    %162 = vmatpush1.bf16.msra.mxu0 0
    %163 = vmatprep.subr.bf16.mxu0 0
    %164 = vmatpush1.bf16.msra.mxu0 0
    %165 = vmatprep.subr.bf16.mxu0 0
    %166 = vmatpush1.bf16.msra.mxu0 0
    %167 = vmatprep.subr.bf16.mxu0 0
    %168 = vmatpush1.bf16.msra.mxu0 0
    %169 = vmatprep.subr.bf16.mxu0 0
    %170 = vmatpush1.bf16.msra.mxu0 0
    %171 = vmatprep.subr.bf16.mxu0 0
    %172 = vmatpush1.bf16.msra.mxu0 0
    %173 = vmatprep.subr.bf16.mxu0 0
    %174 = vmatpush1.bf16.msra.mxu0 0
    %175 = vmatprep.subr.bf16.mxu0 0
    %176 = vmatpush1.bf16.msra.mxu0 0
    %177 = vmatprep.subr.bf16.mxu0 0
    %178 = vmatpush1.bf16.msra.mxu0 0
    %179 = vmatprep.subr.bf16.mxu0 0
    %180 = vmatpush1.bf16.msra.mxu0 0
    %181 = vmatprep.subr.bf16.mxu0 0
    %182 = vmatpush1.bf16.msra.mxu0 0
    %183 = vmatprep.subr.bf16.mxu0 0
    %184 = vmatpush1.bf16.msra.mxu0 0
    %185 = vmatprep.subr.bf16.mxu0 0
    %186 = vmatpush1.bf16.msra.mxu0 0
    %187 = vmatprep.subr.bf16.mxu0 0
    %188 = vmatpush1.bf16.msra.mxu0 0
    %189 = vmatprep.subr.bf16.mxu0 0
    %190 = vmatpush1.bf16.msra.mxu0 0
    %191 = vmatprep.mubr.bf16.mxu0 0
    %192 = vmatmul.mubr.bf16.gmra.mrb[0].mxu0 %v157
    %v193 = vpop.f32.mrb[0].mxu0
    %v194 = vadd.f32 0.0, %v193
    %v195 = vpop.f32.mrb[0].mxu0
    %v196 = vadd.f32 0.0, %v195
    %v197 = vpop.f32.mrb[0].mxu0
    %v198 = vpop.f32.mrb[0].mxu0
    %199 = vdwg.mxu0
    %v202 = vunpack.c.l.b16 %v141
    %v203 = vunpack.c.h.b16 %v141
    %v204 = vunpack.c.l.b16 %v142
    %v205 = vunpack.c.h.b16 %v142
    %v206 = vpack.c.b16 %v204, %v202
    %v207 = vpack.c.b16 %v205, %v203
    %v211 = vsel %vm155, %v138, 0
    %213 = vmatprep.subr.bf16.mxu0 %v207
    %214 = vmatpush1.bf16.msra.mxu0 %v206
    %215 = vmatprep.subr.bf16.mxu0 0
    %216 = vmatpush1.bf16.msra.mxu0 0
    %217 = vmatprep.subr.bf16.mxu0 0
    %218 = vmatpush1.bf16.msra.mxu0 0
    %219 = vmatprep.subr.bf16.mxu0 0
    %220 = vmatpush1.bf16.msra.mxu0 0
    %221 = vmatprep.subr.bf16.mxu0 0
    %222 = vmatpush1.bf16.msra.mxu0 0
    %223 = vmatprep.subr.bf16.mxu0 0
    %224 = vmatpush1.bf16.msra.mxu0 0
    %225 = vmatprep.subr.bf16.mxu0 0
    %226 = vmatpush1.bf16.msra.mxu0 0
    %227 = vmatprep.subr.bf16.mxu0 0
    %228 = vmatpush1.bf16.msra.mxu0 0
    %229 = vmatprep.subr.bf16.mxu0 0
    %230 = vmatpush1.bf16.msra.mxu0 0
    %231 = vmatprep.subr.bf16.mxu0 0
    %232 = vmatpush1.bf16.msra.mxu0 0
    %233 = vmatprep.subr.bf16.mxu0 0
    %234 = vmatpush1.bf16.msra.mxu0 0
    %235 = vmatprep.subr.bf16.mxu0 0
    %236 = vmatpush1.bf16.msra.mxu0 0
    %237 = vmatprep.subr.bf16.mxu0 0
    %238 = vmatpush1.bf16.msra.mxu0 0
    %239 = vmatprep.subr.bf16.mxu0 0
    %240 = vmatpush1.bf16.msra.mxu0 0
    %241 = vmatprep.subr.bf16.mxu0 0
    %242 = vmatpush1.bf16.msra.mxu0 0
    %243 = vmatprep.subr.bf16.mxu0 0
    %244 = vmatpush1.bf16.msra.mxu0 0
    %245 = vmatprep.mubr.bf16.mxu0 0
    %246 = vmatmul.mubr.bf16.gmra.mrb[0].mxu0 %v211
    %v247 = vpop.f32.mrb[0].mxu0
    %v248 = vadd.f32 %v194, %v247
    %v249 = vpop.f32.mrb[0].mxu0
    %v250 = vadd.f32 %v196, %v249
    %v251 = vpop.f32.mrb[0].mxu0
    %v252 = vpop.f32.mrb[0].mxu0
    %253 = vdwg.mxu0
    %v254 = vld [vmem:[%s4] sm:$0x3]
    %v256 = vlaneseq
    %v257 = vshrl.u32 %v256, 7
    %v258 = vsub.s32 0, %v257
    %v259 = vrot.slane %v254, %v258
    %v260 = vlaneseq
    %v261 = vshrl.u32 %v260, 7
    %v262 = vsub.s32 1, %v261
    %v263 = vrot.slane %v254, %v262
    %v266 = vadd.f32 %v248, %v259
    %v267 = vadd.f32 %v250, %v263
    %v268 = vmax.f32 %v266, 0.0
    %v269 = vmax.f32 %v267, 0.0
    %v270 = vpack.c.bf16 %v268, %v268
    %v271 = vpack.c.bf16 %v269, %v269
    %v272 = vld [vmem:[#allocation10] sm:$0xff]
    %v273 = vld [vmem:[#allocation10 + $0x8] sm:$0xff]
    %v274 = vld [vmem:[#allocation10 + $0x10] sm:$0xff]
    %v275 = vld [vmem:[#allocation10 + $0x18] sm:$0xff]
    %v276 = vld [vmem:[#allocation10 + $0x20] sm:$0xff]
    %v277 = vld [vmem:[#allocation10 + $0x28] sm:$0xff]
    %v278 = vld [vmem:[#allocation10 + $0x30] sm:$0xff]
    %v279 = vld [vmem:[#allocation10 + $0x38] sm:$0xff]
    %v280 = vld [vmem:[#allocation10 + $0x40] sm:$0xff]
    %v281 = vld [vmem:[#allocation10 + $0x48] sm:$0xff]
    %v282 = vld [vmem:[#allocation10 + $0x50] sm:$0xff]
    %v283 = vld [vmem:[#allocation10 + $0x58] sm:$0xff]
    %v284 = vld [vmem:[#allocation10 + $0x60] sm:$0xff]
    %v285 = vld [vmem:[#allocation10 + $0x68] sm:$0xff]
    %v286 = vld [vmem:[#allocation10 + $0x70] sm:$0xff]
    %v287 = vld [vmem:[#allocation10 + $0x78] sm:$0xff]
    %v288 = vld [vmem:[#allocation10 + $0x80] sm:$0xff]
    %v289 = vld [vmem:[#allocation10 + $0x88] sm:$0xff]
    %v290 = vld [vmem:[#allocation10 + $0x90] sm:$0xff]
    %v291 = vld [vmem:[#allocation10 + $0x98] sm:$0xff]
    %v292 = vld [vmem:[#allocation10 + $0xa0] sm:$0xff]
    %v293 = vld [vmem:[#allocation10 + $0xa8] sm:$0xff]
    %v294 = vld [vmem:[#allocation10 + $0xb0] sm:$0xff]
    %v295 = vld [vmem:[#allocation10 + $0xb8] sm:$0xff]
    %v296 = vld [vmem:[#allocation10 + $0xc0] sm:$0xff]
    %v297 = vld [vmem:[#allocation10 + $0xc8] sm:$0xff]
    %v298 = vld [vmem:[#allocation10 + $0xd0] sm:$0xff]
    %v299 = vld [vmem:[#allocation10 + $0xd8] sm:$0xff]
    %v300 = vld [vmem:[#allocation10 + $0xe0] sm:$0xff]
    %v301 = vld [vmem:[#allocation10 + $0xe8] sm:$0xff]
    %v302 = vld [vmem:[#allocation10 + $0xf0] sm:$0xff]
    %v303 = vld [vmem:[#allocation10 + $0xf8] sm:$0xff]
    %v304 = vld [vmem:[%s6] sm:$0x3]
    %v306 = vlaneseq
    %v307 = vshrl.u32 %v306, 7
    %v308 = vsub.s32 0, %v307
    %v309 = vrot.slane %v304, %v308
    %v310 = vlaneseq
    %v311 = vshrl.u32 %v310, 7
    %v312 = vsub.s32 1, %v311
    %v313 = vrot.slane %v304, %v312
    %v348 = vunpack.c.l.b16 %v272
    %v349 = vunpack.c.h.b16 %v272
    %v350 = vunpack.c.l.b16 %v273
    %v351 = vunpack.c.h.b16 %v273
    %v352 = vunpack.c.l.b16 %v274
    %v353 = vunpack.c.h.b16 %v274
    %v354 = vunpack.c.l.b16 %v275
    %v355 = vunpack.c.h.b16 %v275
    %v356 = vunpack.c.l.b16 %v276
    %v357 = vunpack.c.h.b16 %v276
    %v358 = vunpack.c.l.b16 %v277
    %v359 = vunpack.c.h.b16 %v277
    %v360 = vunpack.c.l.b16 %v278
    %v361 = vunpack.c.h.b16 %v278
    %v362 = vunpack.c.l.b16 %v279
    %v363 = vunpack.c.h.b16 %v279
    %v364 = vunpack.c.l.b16 %v280
    %v365 = vunpack.c.h.b16 %v280
    %v366 = vunpack.c.l.b16 %v281
    %v367 = vunpack.c.h.b16 %v281
    %v368 = vunpack.c.l.b16 %v282
    %v369 = vunpack.c.h.b16 %v282
    %v370 = vunpack.c.l.b16 %v283
    %v371 = vunpack.c.h.b16 %v283
    %v372 = vunpack.c.l.b16 %v284
    %v373 = vunpack.c.h.b16 %v284
    %v374 = vunpack.c.l.b16 %v285
    %v375 = vunpack.c.h.b16 %v285
    %v376 = vunpack.c.l.b16 %v286
    %v377 = vunpack.c.h.b16 %v286
    %v378 = vunpack.c.l.b16 %v287
    %v379 = vunpack.c.h.b16 %v287
    %v380 = vunpack.c.l.b16 %v288
    %v381 = vunpack.c.h.b16 %v288
    %v382 = vunpack.c.l.b16 %v289
    %v383 = vunpack.c.h.b16 %v289
    %v384 = vunpack.c.l.b16 %v290
    %v385 = vunpack.c.h.b16 %v290
    %v386 = vunpack.c.l.b16 %v291
    %v387 = vunpack.c.h.b16 %v291
    %v388 = vunpack.c.l.b16 %v292
    %v389 = vunpack.c.h.b16 %v292
    %v390 = vunpack.c.l.b16 %v293
    %v391 = vunpack.c.h.b16 %v293
    %v392 = vunpack.c.l.b16 %v294
    %v393 = vunpack.c.h.b16 %v294
    %v394 = vunpack.c.l.b16 %v295
    %v395 = vunpack.c.h.b16 %v295
    %v396 = vunpack.c.l.b16 %v296
    %v397 = vunpack.c.h.b16 %v296
    %v398 = vunpack.c.l.b16 %v297
    %v399 = vunpack.c.h.b16 %v297
    %v400 = vunpack.c.l.b16 %v298
    %v401 = vunpack.c.h.b16 %v298
    %v402 = vunpack.c.l.b16 %v299
    %v403 = vunpack.c.h.b16 %v299
    %v404 = vunpack.c.l.b16 %v300
    %v405 = vunpack.c.h.b16 %v300
    %v406 = vunpack.c.l.b16 %v301
    %v407 = vunpack.c.h.b16 %v301
    %v408 = vunpack.c.l.b16 %v302
    %v409 = vunpack.c.h.b16 %v302
    %v410 = vunpack.c.l.b16 %v303
    %v411 = vunpack.c.h.b16 %v303
    %v412 = vpack.c.b16 %v350, %v348
    %v413 = vpack.c.b16 %v351, %v349
    %v414 = vpack.c.b16 %v354, %v352
    %v415 = vpack.c.b16 %v355, %v353
    %v416 = vpack.c.b16 %v358, %v356
    %v417 = vpack.c.b16 %v359, %v357
    %v418 = vpack.c.b16 %v362, %v360
    %v419 = vpack.c.b16 %v363, %v361
    %v420 = vpack.c.b16 %v366, %v364
    %v421 = vpack.c.b16 %v367, %v365
    %v422 = vpack.c.b16 %v370, %v368
    %v423 = vpack.c.b16 %v371, %v369
    %v424 = vpack.c.b16 %v374, %v372
    %v425 = vpack.c.b16 %v375, %v373
    %v426 = vpack.c.b16 %v378, %v376
    %v427 = vpack.c.b16 %v379, %v377
    %v428 = vpack.c.b16 %v382, %v380
    %v429 = vpack.c.b16 %v383, %v381
    %v430 = vpack.c.b16 %v386, %v384
    %v431 = vpack.c.b16 %v387, %v385
    %v432 = vpack.c.b16 %v390, %v388
    %v433 = vpack.c.b16 %v391, %v389
    %v434 = vpack.c.b16 %v394, %v392
    %v435 = vpack.c.b16 %v395, %v393
    %v436 = vpack.c.b16 %v398, %v396
    %v437 = vpack.c.b16 %v399, %v397
    %v438 = vpack.c.b16 %v402, %v400
    %v439 = vpack.c.b16 %v403, %v401
    %v440 = vpack.c.b16 %v406, %v404
    %v441 = vpack.c.b16 %v407, %v405
    %v442 = vpack.c.b16 %v410, %v408
    %v443 = vpack.c.b16 %v411, %v409
    %476 = vmatprep.subr.bf16.mxu0 %v413
    %477 = vmatpush1.bf16.msra.mxu0 %v412
    %478 = vmatprep.subr.bf16.mxu0 %v415
    %479 = vmatpush1.bf16.msra.mxu0 %v414
    %480 = vmatprep.subr.bf16.mxu0 %v417
    %481 = vmatpush1.bf16.msra.mxu0 %v416
    %482 = vmatprep.subr.bf16.mxu0 %v419
    %483 = vmatpush1.bf16.msra.mxu0 %v418
    %484 = vmatprep.subr.bf16.mxu0 %v421
    %485 = vmatpush1.bf16.msra.mxu0 %v420
    %486 = vmatprep.subr.bf16.mxu0 %v423
    %487 = vmatpush1.bf16.msra.mxu0 %v422
    %488 = vmatprep.subr.bf16.mxu0 %v425
    %489 = vmatpush1.bf16.msra.mxu0 %v424
    %490 = vmatprep.subr.bf16.mxu0 %v427
    %491 = vmatpush1.bf16.msra.mxu0 %v426
    %492 = vmatprep.subr.bf16.mxu0 %v429
    %493 = vmatpush1.bf16.msra.mxu0 %v428
    %494 = vmatprep.subr.bf16.mxu0 %v431
    %495 = vmatpush1.bf16.msra.mxu0 %v430
    %496 = vmatprep.subr.bf16.mxu0 %v433
    %497 = vmatpush1.bf16.msra.mxu0 %v432
    %498 = vmatprep.subr.bf16.mxu0 %v435
    %499 = vmatpush1.bf16.msra.mxu0 %v434
    %500 = vmatprep.subr.bf16.mxu0 %v437
    %501 = vmatpush1.bf16.msra.mxu0 %v436
    %502 = vmatprep.subr.bf16.mxu0 %v439
    %503 = vmatpush1.bf16.msra.mxu0 %v438
    %504 = vmatprep.subr.bf16.mxu0 %v441
    %505 = vmatpush1.bf16.msra.mxu0 %v440
    %506 = vmatprep.subr.bf16.mxu0 %v443
    %507 = vmatpush1.bf16.msra.mxu0 %v442
    %508 = vmatprep.mubr.bf16.mxu0 %v271
    %509 = vmatmul.mubr.bf16.gmra.mrb[0].mxu0 %v270
    %v510 = vpop.f32.mrb[0].mxu0
    %v511 = vadd.f32 %v309, %v510
    %v512 = vpop.f32.mrb[0].mxu0
    %v513 = vadd.f32 %v313, %v512
    %v514 = vpop.f32.mrb[0].mxu0
    %v515 = vpop.f32.mrb[0].mxu0
    %516 = vdwg.mxu0
    %v517 = vmax.f32 %v511, 0.0
    %v518 = vmax.f32 %v513, 0.0
    %v519 = vpack.c.bf16 %v517, %v517
    %v520 = vpack.c.bf16 %v518, %v518
    %v521 = vld [vmem:[#allocation11] sm:$0xff]
    %v522 = vld [vmem:[#allocation11 + $0x8] sm:$0xff]
    %v523 = vld [vmem:[#allocation11 + $0x10] sm:$0xff]
    %v524 = vld [vmem:[#allocation11 + $0x18] sm:$0xff]
    %v525 = vld [vmem:[#allocation11 + $0x20] sm:$0xff]
    %v526 = vld [vmem:[#allocation11 + $0x28] sm:$0xff]
    %v527 = vld [vmem:[#allocation11 + $0x30] sm:$0xff]
    %v528 = vld [vmem:[#allocation11 + $0x38] sm:$0xff]
    %v529 = vld [vmem:[#allocation11 + $0x40] sm:$0xff]
    %v530 = vld [vmem:[#allocation11 + $0x48] sm:$0xff]
    %v531 = vld [vmem:[#allocation11 + $0x50] sm:$0xff]
    %v532 = vld [vmem:[#allocation11 + $0x58] sm:$0xff]
    %v533 = vld [vmem:[#allocation11 + $0x60] sm:$0xff]
    %v534 = vld [vmem:[#allocation11 + $0x68] sm:$0xff]
    %v535 = vld [vmem:[#allocation11 + $0x70] sm:$0xff]
    %v536 = vld [vmem:[#allocation11 + $0x78] sm:$0xff]
    %v537 = vld [vmem:[#allocation11 + $0x80] sm:$0xff]
    %v538 = vld [vmem:[#allocation11 + $0x88] sm:$0xff]
    %v539 = vld [vmem:[#allocation11 + $0x90] sm:$0xff]
    %v540 = vld [vmem:[#allocation11 + $0x98] sm:$0xff]
    %v541 = vld [vmem:[#allocation11 + $0xa0] sm:$0xff]
    %v542 = vld [vmem:[#allocation11 + $0xa8] sm:$0xff]
    %v543 = vld [vmem:[#allocation11 + $0xb0] sm:$0xff]
    %v544 = vld [vmem:[#allocation11 + $0xb8] sm:$0xff]
    %v545 = vld [vmem:[#allocation11 + $0xc0] sm:$0xff]
    %v546 = vld [vmem:[#allocation11 + $0xc8] sm:$0xff]
    %v547 = vld [vmem:[#allocation11 + $0xd0] sm:$0xff]
    %v548 = vld [vmem:[#allocation11 + $0xd8] sm:$0xff]
    %v549 = vld [vmem:[#allocation11 + $0xe0] sm:$0xff]
    %v550 = vld [vmem:[#allocation11 + $0xe8] sm:$0xff]
    %v551 = vld [vmem:[#allocation11 + $0xf0] sm:$0xff]
    %v552 = vld [vmem:[#allocation11 + $0xf8] sm:$0xff]
    %v553 = vld [vmem:[%s8] sm:$0x3]
    %v555 = vlaneseq
    %v556 = vshrl.u32 %v555, 7
    %v557 = vsub.s32 0, %v556
    %v558 = vrot.slane %v553, %v557
    %v559 = vlaneseq
    %v560 = vshrl.u32 %v559, 7
    %v561 = vsub.s32 1, %v560
    %v562 = vrot.slane %v553, %v561
    %v597 = vunpack.c.l.b16 %v521
    %v598 = vunpack.c.h.b16 %v521
    %v599 = vunpack.c.l.b16 %v522
    %v600 = vunpack.c.h.b16 %v522
    %v601 = vunpack.c.l.b16 %v523
    %v602 = vunpack.c.h.b16 %v523
    %v603 = vunpack.c.l.b16 %v524
    %v604 = vunpack.c.h.b16 %v524
    %v605 = vunpack.c.l.b16 %v525
    %v606 = vunpack.c.h.b16 %v525
    %v607 = vunpack.c.l.b16 %v526
    %v608 = vunpack.c.h.b16 %v526
    %v609 = vunpack.c.l.b16 %v527
    %v610 = vunpack.c.h.b16 %v527
    %v611 = vunpack.c.l.b16 %v528
    %v612 = vunpack.c.h.b16 %v528
    %v613 = vunpack.c.l.b16 %v529
    %v614 = vunpack.c.h.b16 %v529
    %v615 = vunpack.c.l.b16 %v530
    %v616 = vunpack.c.h.b16 %v530
    %v617 = vunpack.c.l.b16 %v531
    %v618 = vunpack.c.h.b16 %v531
    %v619 = vunpack.c.l.b16 %v532
    %v620 = vunpack.c.h.b16 %v532
    %v621 = vunpack.c.l.b16 %v533
    %v622 = vunpack.c.h.b16 %v533
    %v623 = vunpack.c.l.b16 %v534
    %v624 = vunpack.c.h.b16 %v534
    %v625 = vunpack.c.l.b16 %v535
    %v626 = vunpack.c.h.b16 %v535
    %v627 = vunpack.c.l.b16 %v536
    %v628 = vunpack.c.h.b16 %v536
    %v629 = vunpack.c.l.b16 %v537
    %v630 = vunpack.c.h.b16 %v537
    %v631 = vunpack.c.l.b16 %v538
    %v632 = vunpack.c.h.b16 %v538
    %v633 = vunpack.c.l.b16 %v539
    %v634 = vunpack.c.h.b16 %v539
    %v635 = vunpack.c.l.b16 %v540
    %v636 = vunpack.c.h.b16 %v540
    %v637 = vunpack.c.l.b16 %v541
    %v638 = vunpack.c.h.b16 %v541
    %v639 = vunpack.c.l.b16 %v542
    %v640 = vunpack.c.h.b16 %v542
    %v641 = vunpack.c.l.b16 %v543
    %v642 = vunpack.c.h.b16 %v543
    %v643 = vunpack.c.l.b16 %v544
    %v644 = vunpack.c.h.b16 %v544
    %v645 = vunpack.c.l.b16 %v545
    %v646 = vunpack.c.h.b16 %v545
    %v647 = vunpack.c.l.b16 %v546
    %v648 = vunpack.c.h.b16 %v546
    %v649 = vunpack.c.l.b16 %v547
    %v650 = vunpack.c.h.b16 %v547
    %v651 = vunpack.c.l.b16 %v548
    %v652 = vunpack.c.h.b16 %v548
    %v653 = vunpack.c.l.b16 %v549
    %v654 = vunpack.c.h.b16 %v549
    %v655 = vunpack.c.l.b16 %v550
    %v656 = vunpack.c.h.b16 %v550
    %v657 = vunpack.c.l.b16 %v551
    %v658 = vunpack.c.h.b16 %v551
    %v659 = vunpack.c.l.b16 %v552
    %v660 = vunpack.c.h.b16 %v552
    %v661 = vpack.c.b16 %v599, %v597
    %v662 = vpack.c.b16 %v600, %v598
    %v663 = vpack.c.b16 %v603, %v601
    %v664 = vpack.c.b16 %v604, %v602
    %v665 = vpack.c.b16 %v607, %v605
    %v666 = vpack.c.b16 %v608, %v606
    %v667 = vpack.c.b16 %v611, %v609
    %v668 = vpack.c.b16 %v612, %v610
    %v669 = vpack.c.b16 %v615, %v613
    %v670 = vpack.c.b16 %v616, %v614
    %v671 = vpack.c.b16 %v619, %v617
    %v672 = vpack.c.b16 %v620, %v618
    %v673 = vpack.c.b16 %v623, %v621
    %v674 = vpack.c.b16 %v624, %v622
    %v675 = vpack.c.b16 %v627, %v625
    %v676 = vpack.c.b16 %v628, %v626
    %v677 = vpack.c.b16 %v631, %v629
    %v678 = vpack.c.b16 %v632, %v630
    %v679 = vpack.c.b16 %v635, %v633
    %v680 = vpack.c.b16 %v636, %v634
    %v681 = vpack.c.b16 %v639, %v637
    %v682 = vpack.c.b16 %v640, %v638
    %v683 = vpack.c.b16 %v643, %v641
    %v684 = vpack.c.b16 %v644, %v642
    %v685 = vpack.c.b16 %v647, %v645
    %v686 = vpack.c.b16 %v648, %v646
    %v687 = vpack.c.b16 %v651, %v649
    %v688 = vpack.c.b16 %v652, %v650
    %v689 = vpack.c.b16 %v655, %v653
    %v690 = vpack.c.b16 %v656, %v654
    %v691 = vpack.c.b16 %v659, %v657
    %v692 = vpack.c.b16 %v660, %v658
    %725 = vmatprep.subr.bf16.mxu0 %v662
    %726 = vmatpush1.bf16.msra.mxu0 %v661
    %727 = vmatprep.subr.bf16.mxu0 %v664
    %728 = vmatpush1.bf16.msra.mxu0 %v663
    %729 = vmatprep.subr.bf16.mxu0 %v666
    %730 = vmatpush1.bf16.msra.mxu0 %v665
    %731 = vmatprep.subr.bf16.mxu0 %v668
    %732 = vmatpush1.bf16.msra.mxu0 %v667
    %733 = vmatprep.subr.bf16.mxu0 %v670
    %734 = vmatpush1.bf16.msra.mxu0 %v669
    %735 = vmatprep.subr.bf16.mxu0 %v672
    %736 = vmatpush1.bf16.msra.mxu0 %v671
    %737 = vmatprep.subr.bf16.mxu0 %v674
    %738 = vmatpush1.bf16.msra.mxu0 %v673
    %739 = vmatprep.subr.bf16.mxu0 %v676
    %740 = vmatpush1.bf16.msra.mxu0 %v675
    %741 = vmatprep.subr.bf16.mxu0 %v678
    %742 = vmatpush1.bf16.msra.mxu0 %v677
    %743 = vmatprep.subr.bf16.mxu0 %v680
    %744 = vmatpush1.bf16.msra.mxu0 %v679
    %745 = vmatprep.subr.bf16.mxu0 %v682
    %746 = vmatpush1.bf16.msra.mxu0 %v681
    %747 = vmatprep.subr.bf16.mxu0 %v684
    %748 = vmatpush1.bf16.msra.mxu0 %v683
    %749 = vmatprep.subr.bf16.mxu0 %v686
    %750 = vmatpush1.bf16.msra.mxu0 %v685
    %751 = vmatprep.subr.bf16.mxu0 %v688
    %752 = vmatpush1.bf16.msra.mxu0 %v687
    %753 = vmatprep.subr.bf16.mxu0 %v690
    %754 = vmatpush1.bf16.msra.mxu0 %v689
    %755 = vmatprep.subr.bf16.mxu0 %v692
    %756 = vmatpush1.bf16.msra.mxu0 %v691
    %757 = vmatprep.mubr.bf16.mxu0 %v520
    %758 = vmatmul.mubr.bf16.gmra.mrb[0].mxu0 %v519
    %v759 = vpop.f32.mrb[0].mxu0
    %v760 = vadd.f32 %v558, %v759
    %v761 = vpop.f32.mrb[0].mxu0
    %v762 = vadd.f32 %v562, %v761
    %v763 = vpop.f32.mrb[0].mxu0
    %v764 = vpop.f32.mrb[0].mxu0
    %765 = vdwg.mxu0
    %v766 = vmax.f32 %v760, 0.0
    %v767 = vmax.f32 %v762, 0.0
    %v768 = vpack.c.bf16 %v766, %v766
    %v769 = vpack.c.bf16 %v767, %v767
    %v770 = vld [vmem:[#allocation13] sm:$0xf]
    %v771 = vld [vmem:[#allocation13 + $0x4] sm:$0xf]
    %v772 = vld [vmem:[#allocation13 + $0x8] sm:$0xf]
    %v773 = vld [vmem:[#allocation13 + $0xc] sm:$0xf]
    %v774 = vld [vmem:[#allocation13 + $0x10] sm:$0xf]
    %v775 = vld [vmem:[#allocation13 + $0x14] sm:$0xf]
    %v776 = vld [vmem:[#allocation13 + $0x18] sm:$0xf]
    %v777 = vld [vmem:[#allocation13 + $0x1c] sm:$0xf]
    %v778 = vld [vmem:[#allocation13 + $0x20] sm:$0xf]
    %v779 = vld [vmem:[#allocation13 + $0x24] sm:$0xf]
    %v780 = vld [vmem:[#allocation13 + $0x28] sm:$0xf]
    %v781 = vld [vmem:[#allocation13 + $0x2c] sm:$0xf]
    %v782 = vld [vmem:[#allocation13 + $0x30] sm:$0xf]
    %v783 = vld [vmem:[#allocation13 + $0x34] sm:$0xf]
    %v784 = vld [vmem:[#allocation13 + $0x38] sm:$0xf]
    %v785 = vld [vmem:[#allocation13 + $0x3c] sm:$0xf]
    %v786 = vld [vmem:[#allocation13 + $0x40] sm:$0xf]
    %v787 = vld [vmem:[#allocation13 + $0x44] sm:$0xf]
    %v788 = vld [vmem:[#allocation13 + $0x48] sm:$0xf]
    %v789 = vld [vmem:[#allocation13 + $0x4c] sm:$0xf]
    %v790 = vld [vmem:[#allocation13 + $0x50] sm:$0xf]
    %v791 = vld [vmem:[#allocation13 + $0x54] sm:$0xf]
    %v792 = vld [vmem:[#allocation13 + $0x58] sm:$0xf]
    %v793 = vld [vmem:[#allocation13 + $0x5c] sm:$0xf]
    %v794 = vld [vmem:[#allocation13 + $0x60] sm:$0xf]
    %v795 = vld [vmem:[#allocation13 + $0x64] sm:$0xf]
    %v796 = vld [vmem:[#allocation13 + $0x68] sm:$0xf]
    %v797 = vld [vmem:[#allocation13 + $0x6c] sm:$0xf]
    %v798 = vld [vmem:[#allocation13 + $0x70] sm:$0xf]
    %v799 = vld [vmem:[#allocation13 + $0x74] sm:$0xf]
    %v800 = vld [vmem:[#allocation13 + $0x78] sm:$0xf]
    %v801 = vld [vmem:[#allocation13 + $0x7c] sm:$0xf]
    %v802 = vld [vmem:[%s10] sm:$0x1]
    %v804 = vlaneseq
    %v805 = vshrl.u32 %v804, 7
    %v806 = vsub.s32 0, %v805
    %v807 = vrot.slane %v802, %v806
    %v841 = vunpack.c.l.b16 %v770
    %v842 = vunpack.c.l.b16 %v771
    %v843 = vunpack.c.l.b16 %v772
    %v844 = vunpack.c.l.b16 %v773
    %v845 = vunpack.c.l.b16 %v774
    %v846 = vunpack.c.l.b16 %v775
    %v847 = vunpack.c.l.b16 %v776
    %v848 = vunpack.c.l.b16 %v777
    %v849 = vunpack.c.l.b16 %v778
    %v850 = vunpack.c.l.b16 %v779
    %v851 = vunpack.c.l.b16 %v780
    %v852 = vunpack.c.l.b16 %v781
    %v853 = vunpack.c.l.b16 %v782
    %v854 = vunpack.c.l.b16 %v783
    %v855 = vunpack.c.l.b16 %v784
    %v856 = vunpack.c.l.b16 %v785
    %v857 = vunpack.c.l.b16 %v786
    %v858 = vunpack.c.l.b16 %v787
    %v859 = vunpack.c.l.b16 %v788
    %v860 = vunpack.c.l.b16 %v789
    %v861 = vunpack.c.l.b16 %v790
    %v862 = vunpack.c.l.b16 %v791
    %v863 = vunpack.c.l.b16 %v792
    %v864 = vunpack.c.l.b16 %v793
    %v865 = vunpack.c.l.b16 %v794
    %v866 = vunpack.c.l.b16 %v795
    %v867 = vunpack.c.l.b16 %v796
    %v868 = vunpack.c.l.b16 %v797
    %v869 = vunpack.c.l.b16 %v798
    %v870 = vunpack.c.l.b16 %v799
    %v871 = vunpack.c.l.b16 %v800
    %v872 = vunpack.c.l.b16 %v801
    %v873 = vpack.c.b16 %v842, %v841
    %v874 = vpack.c.b16 %v844, %v843
    %v875 = vpack.c.b16 %v846, %v845
    %v876 = vpack.c.b16 %v848, %v847
    %v877 = vpack.c.b16 %v850, %v849
    %v878 = vpack.c.b16 %v852, %v851
    %v879 = vpack.c.b16 %v854, %v853
    %v880 = vpack.c.b16 %v856, %v855
    %v881 = vpack.c.b16 %v858, %v857
    %v882 = vpack.c.b16 %v860, %v859
    %v883 = vpack.c.b16 %v862, %v861
    %v884 = vpack.c.b16 %v864, %v863
    %v885 = vpack.c.b16 %v866, %v865
    %v886 = vpack.c.b16 %v868, %v867
    %v887 = vpack.c.b16 %v870, %v869
    %v888 = vpack.c.b16 %v872, %v871
    %905 = vmatprep.subr.bf16.mxu0 0
    %906 = vmatpush1.bf16.msra.mxu0 %v873
    %907 = vmatprep.subr.bf16.mxu0 0
    %908 = vmatpush1.bf16.msra.mxu0 %v874
    %909 = vmatprep.subr.bf16.mxu0 0
    %910 = vmatpush1.bf16.msra.mxu0 %v875
    %911 = vmatprep.subr.bf16.mxu0 0
    %912 = vmatpush1.bf16.msra.mxu0 %v876
    %913 = vmatprep.subr.bf16.mxu0 0
    %914 = vmatpush1.bf16.msra.mxu0 %v877
    %915 = vmatprep.subr.bf16.mxu0 0
    %916 = vmatpush1.bf16.msra.mxu0 %v878
    %917 = vmatprep.subr.bf16.mxu0 0
    %918 = vmatpush1.bf16.msra.mxu0 %v879
    %919 = vmatprep.subr.bf16.mxu0 0
    %920 = vmatpush1.bf16.msra.mxu0 %v880
    %921 = vmatprep.subr.bf16.mxu0 0
    %922 = vmatpush1.bf16.msra.mxu0 %v881
    %923 = vmatprep.subr.bf16.mxu0 0
    %924 = vmatpush1.bf16.msra.mxu0 %v882
    %925 = vmatprep.subr.bf16.mxu0 0
    %926 = vmatpush1.bf16.msra.mxu0 %v883
    %927 = vmatprep.subr.bf16.mxu0 0
    %928 = vmatpush1.bf16.msra.mxu0 %v884
    %929 = vmatprep.subr.bf16.mxu0 0
    %930 = vmatpush1.bf16.msra.mxu0 %v885
    %931 = vmatprep.subr.bf16.mxu0 0
    %932 = vmatpush1.bf16.msra.mxu0 %v886
    %933 = vmatprep.subr.bf16.mxu0 0
    %934 = vmatpush1.bf16.msra.mxu0 %v887
    %935 = vmatprep.subr.bf16.mxu0 0
    %936 = vmatpush1.bf16.msra.mxu0 %v888
    %937 = vmatprep.mubr.bf16.mxu0 %v769
    %938 = vmatmul.mubr.bf16.gmra.mrb[0].mxu0 %v768
    %v939 = vpop.f32.mrb[0].mxu0
    %v940 = vadd.f32 %v807, %v939
    %v941 = vpop.f32.mrb[0].mxu0
    %v942 = vpop.f32.mrb[0].mxu0
    %v943 = vpop.f32.mrb[0].mxu0
    %944 = vdwg.mxu0
    %v945 = vtanh.pop %v940
    %v946 = vld [vmem:[%s11] sm:$0x1]
    %v948 = vlaneseq
    %v949 = vshrl.u32 %v948, 7
    %v950 = vsub.s32 0, %v949
    %v951 = vrot.slane %v946, %v950
    %v953 = vmul.f32 %v945, %v951
    %v954 = vld [vmem:[%s12] sm:$0x1]
    %v956 = vlaneseq
    %v957 = vshrl.u32 %v956, 7
    %v958 = vsub.s32 0, %v957
    %v959 = vrot.slane %v954, %v958
    %v961 = vadd.f32 %v953, %v959
    %962 = vst [vmem:[#allocation14] sm:$0xff] %v961
    // Predicated region
    $region82: #{tpu_custom_call.1} parent=1 // pred_check
      _
    $region83: #{tpu_custom_call.1} parent=1 // pred_check_branch
      %964 = sbr.rel (0) target = $region85
    $region84: #{tpu_custom_call.1} parent=1 // pred_region
      %s966 = ssub.s32 128, 128
      %967 = vsyncadd [#allocation4], %s966
      %s969 = sshll.u32 [#allocation14], 4
      %s970 = int_to_ptr.vmem [resolvable:$true] %s969
      %972 = dma.vmem_to_hbm [thread:$0]  %s970, 128, %s13, [#allocation4]
    $region85: #{tpu_custom_call.1} parent=1 // pred_fallthru
      _
    // Predicated region
    $region86: #{tpu_custom_call.1} parent=1 // pred_check
      _
    $region87: #{tpu_custom_call.1} parent=1 // pred_check_branch
      %974 = sbr.rel (0) target = $region89
    $region88: #{tpu_custom_call.1} parent=1 // pred_region
      %975 = dma.done [#allocation4], 128
    $region89: #{tpu_custom_call.1} parent=1 // pred_fallthru
      _
    %976 = vsyncpa [#allocation3], 1
    %977 = vsyncpa [#allocation6], 1
    %978 = vsyncpa [#allocation9], 1
    %979 = vsyncpa [#allocation12], 1
    %980 = vsyncpa [#allocation4], 1

</llo_original>
